<compile_context>
chip_gen: v7x
topology: tpu7x:2x2x1
jax: 0.10.0
libtpu: 0.0.40
codegen_flags: <defaults>
</compile_context>

<pallas_src>
import functools

import jax
import jax.numpy as jnp
from jax.experimental import pallas as pl
from jax.experimental.pallas import tpu as pltpu

KH = KW = 3      # 3x3 conv (kernel_size=3, padding='same', stride=1, dilation=1)
EPS = 1e-5       # nn.InstanceNorm2d default eps


def conv_bn_relu_kernel(x_ref, r_ref, sel_ref, selt_ref, gsum_ref, gbct_ref,
                        o_ref, *, NB, H, W, Cout):
    """One grid step processes NB batch samples (NB == N on 1-TC chips, 1 on 2-TC).

    x_ref:    (NB*H, KH*Wp*Cin)    im2col'ed input rows (conv_dtype)
    r_ref:    (KH*Wp*Cin, W*Cout)  block-Toeplitz conv weight (conv_dtype)
    sel_ref:  (W*Cout, Cout)       lane -> channel sum selector        (f32, 0/1)
    selt_ref: (Cout, W*Cout)       channel -> lane broadcast selector  (f32, 0/1)
    gsum_ref: (2*NB, 2*NB*H)       per-sample H-row group-sum matrix   (f32, 0/1)
    gbct_ref: (2*NB*H, 2*NB)       per-sample row-broadcast matrix     (f32, 0/1)
    o_ref:    (NB*H, W*Cout)       lane-dense output tile (f32)
    """
    NBH = NB * H

    # --- Conv2d 3x3 / stride 1 / 'same' / no bias: ONE MXU matmul -----------
    # The full kh/kw/ci im2col was done in the wrapper, so there are no
    # in-kernel panel shifts/adds; the matmul result IS the output tile.
    y = jnp.dot(x_ref[...], r_ref[...], preferred_element_type=jnp.float32)

    # --- ReLU (apply_act=True, act='relu'), f32 on the VPU -------------------
    y = jnp.maximum(y, 0.0)                                   # (NB*H, W*Cout)

    # --- InstanceNorm2d (affine=False, biased var, eps=1e-5), one pass -------
    # Per-channel sums over W via one fused selector matmul of [y ; y*y]
    # (single MXU push), then per-sample sums over H via a 0/1 group-sum
    # matmul (also MXU) -- no in-kernel reshapes or sublane reductions.
    yy = jnp.concatenate([y, y * y], axis=0)                  # (2*NB*H, W*Cout)
    t = jnp.dot(yy, sel_ref[...], preferred_element_type=jnp.float32)
    sums = jnp.dot(gsum_ref[...], t,
                   preferred_element_type=jnp.float32) * (1.0 / (H * W))
    mean = sums[:NB]                                          # (NB, Cout)
    var = jnp.maximum(sums[NB:] - mean * mean, 0.0)           # clamped 1-pass var
    rstd = jax.lax.rsqrt(var + EPS)                           # EUP slot

    # Pre-fold to y*scale + bias and broadcast the per-channel values back to
    # the interleaved (w*Cout + co) lane layout and to the per-sample rows via
    # two 0/1 selector matmuls (idle MXU) -- replaces jnp.tile (XLU) and any
    # sublane relayouts.
    sb = jnp.concatenate([rstd, -mean * rstd], axis=0)        # (2*NB, Cout)
    sb_l = jnp.dot(sb, selt_ref[...], preferred_element_type=jnp.float32)
    full = jnp.dot(gbct_ref[...], sb_l,
                   preferred_element_type=jnp.float32)        # (2*NB*H, W*Cout)

    o_ref[...] = (y * full[:NBH] + full[NBH:]).astype(o_ref.dtype)


def _build_im2col_rhs(w_oihw, W):
    """Scatter the (Cout, Cin, 3, 3) conv weight into the full im2col RHS.

    Returns (KH*Wp*Cin, W*Cout) with row index = kh*(Wp*Cin) + wp*Cin + ci and
    column index = w*Cout + co, so the wrapper-built im2col LHS rows produce
    the whole 'same' conv in a single matmul.  Pure layout plumbing (zero
    FLOPs), built once when the weights are bound.
    """
    Cout, Cin, kh, kw = w_oihw.shape
    assert (kh, kw) == (KH, KW), (kh, kw)
    Wp = W + KW - 1
    w_hwio = jnp.transpose(w_oihw, (2, 3, 1, 0))      # (KH, KW, Cin, Cout)
    w_flat = w_hwio.reshape(KH, KW * Cin, Cout)       # row = kw*Cin + ci
    cols = []
    for w in range(W):                                # output column w
        pad_lo = w * Cin
        pad_hi = (Wp - KW - w) * Cin
        cols.append(jnp.pad(w_flat, ((0, 0), (pad_lo, pad_hi), (0, 0))))
    r = jnp.concatenate(cols, axis=2)                 # (KH, Wp*Cin, W*Cout)
    return r.reshape(KH * Wp * Cin, W * Cout)


def _build_im2col_lhs(x_nchw, conv_dtype):
    """NCHW -> padded, kh-unrolled, row-flattened im2col LHS (N*H, KH*Wp*Cin)."""
    N, Cin, H, W = x_nchw.shape
    pad = (KH - 1) // 2
    Wp = W + 2 * pad
    x_nhwc = jnp.transpose(x_nchw, (0, 2, 3, 1))
    x_pad = jnp.pad(x_nhwc, ((0, 0), (pad, pad), (pad, pad), (0, 0)))
    taps = [x_pad[:, k:k + H].reshape(N, H, Wp * Cin) for k in range(KH)]
    lhs = jnp.concatenate(taps, axis=-1)              # (N, H, KH*Wp*Cin)
    return lhs.reshape(N * H, KH * Wp * Cin).astype(conv_dtype)


def _tensorcores_per_chip():
    """Crude chip detection: 2 TensorCores per chip on v7x (and v4 megacore)."""
    try:
        kind = jax.devices()[0].device_kind.lower()
    except Exception:
        return 1
    return 2 if ("7" in kind or "v4" in kind) else 1


def make_conv_bn_relu(w_oihw, H, W, *, conv_dtype=jnp.bfloat16,
                      samples_per_step=None, output_layout="NCHW"):
    """Bind the conv weight once and return a jitted forward(x_nchw) callable.

    conv_dtype: dtype of the conv-matmul operands (bf16 is MXU-native on
      v5e/v6e/v7x; ReLU / InstanceNorm arithmetic is always f32).  Use
      jnp.float32 for bit-accurate validation.
    samples_per_step: batch elements per grid step.  None -> auto: fold the
      whole batch into one step on single-TC chips (v5e/v6e), one sample per
      step (grid=(N,), "parallel") on 2-TC chips (v7x) so each core gets one.
    output_layout: "NCHW" (PyTorch convention) or "NHWC" to let a
      channels-last consumer skip the final transpose.
    """
    Cout, Cin = int(w_oihw.shape[0]), int(w_oihw.shape[1])
    WC = W * Cout
    Kd = KH * (W + KW - 1) * Cin

    # Hoisted out of the per-call path: built once at weight-bind time.
    rhs = _build_im2col_rhs(w_oihw, W).astype(conv_dtype)            # (Kd, WC)
    eye = jnp.eye(Cout, dtype=jnp.float32)
    sel = jnp.tile(eye, (W, 1))                                      # (WC, Cout)
    selt = jnp.tile(eye, (1, W))                                     # (Cout, WC)
    # NOTE: rhs is O(W^2*Cin*Cout); at this config it is ~110 KB.  For very
    # large frames it would need a W-tiled grid axis + vmem_limit_bytes.

    @jax.jit
    def apply(x_nchw):
        N = x_nchw.shape[0]
        assert x_nchw.shape == (N, Cin, H, W), x_nchw.shape
        nb = samples_per_step
        if nb is None:
            nb = 1 if _tensorcores_per_chip() >= 2 else N
        nb = max(1, min(int(nb), N))
        assert N % nb == 0, (N, nb)

        lhs = _build_im2col_lhs(x_nchw, conv_dtype)                  # (N*H, Kd)

        # 0/1 per-sample group-sum / row-broadcast matrices (tiny constants).
        grp = jnp.arange(2 * nb * H, dtype=jnp.int32) // H
        gsum = (jnp.arange(2 * nb, dtype=jnp.int32)[:, None]
                == grp[None, :]).astype(jnp.float32)                 # (2*nb, 2*nb*H)
        gbct = gsum.T                                                # (2*nb*H, 2*nb)

        kernel = functools.partial(conv_bn_relu_kernel,
                                   NB=nb, H=H, W=W, Cout=Cout)
        out_flat = pl.pallas_call(
            kernel,
            out_shape=jax.ShapeDtypeStruct((N * H, WC), jnp.float32),
            grid_spec=pltpu.PrefetchScalarGridSpec(
                num_scalar_prefetch=0,
                grid=(N // nb,),
                in_specs=[
                    pl.BlockSpec((nb * H, Kd), lambda n: (n, 0)),
                    # Grid-invariant operands (constant index_map).  At these
                    # shapes the extra double-buffer is ~0.1 MB total, so we
                    # keep the default pipelining rather than pl.Buffered(1).
                    pl.BlockSpec((Kd, WC), lambda n: (0, 0)),
                    pl.BlockSpec((WC, Cout), lambda n: (0, 0)),
                    pl.BlockSpec((Cout, WC), lambda n: (0, 0)),
                    pl.BlockSpec((2 * nb, 2 * nb * H), lambda n: (0, 0)),
                    pl.BlockSpec((2 * nb * H, 2 * nb), lambda n: (0, 0)),
                ],
                out_specs=pl.BlockSpec((nb * H, WC), lambda n: (n, 0)),
            ),
            compiler_params=pltpu.CompilerParams(
                dimension_semantics=("parallel",)),
        )(lhs, rhs, sel, selt, gsum, gbct)

        out = out_flat.reshape(N, H, W, Cout)
        if output_layout == "NHWC":
            return out
        return jnp.transpose(out, (0, 3, 1, 2))      # PyTorch NCHW convention

    return apply


def conv_bn_relu_reference(x_nchw, w_oihw, operand_dtype=jnp.float32):
    """Pure-JAX reference matching the PyTorch module forward.

    operand_dtype=bfloat16 reproduces the kernel's MXU conv-operand
    quantization (products/accumulation still f32) for a like-for-like check.
    """
    x = x_nchw.astype(operand_dtype).astype(jnp.float32)
    w = w_oihw.astype(operand_dtype).astype(jnp.float32)
    y = jax.lax.conv_general_dilated(
        x, w, window_strides=(1, 1), padding=((1, 1), (1, 1)),
        dimension_numbers=("NCHW", "OIHW", "NCHW"),
        precision=jax.lax.Precision.HIGHEST)
    y = jnp.maximum(y, 0.0)
    mean = jnp.mean(y, axis=(2, 3), keepdims=True)
    var = jnp.mean((y - mean) ** 2, axis=(2, 3), keepdims=True)
    return (y - mean) * jax.lax.rsqrt(var + EPS)


if __name__ == "__main__":
    key = jax.random.PRNGKey(0)
    kx, kw = jax.random.split(key)

    N, Cin, Cout, H, W = 2, 4, 8, 16, 16
    x = jax.random.normal(kx, (N, Cin, H, W), dtype=jnp.float32)
    # Conv2d weight (bias=False): shape (out_c, in_c, 3, 3)
    w = 0.1 * jax.random.normal(kw, (Cout, Cin, KH, KW), dtype=jnp.float32)

    # Default path: bf16 MXU operands for the conv matmul, f32 everything else.
    forward = make_conv_bn_relu(w, H, W)
    out = jax.block_until_ready(forward(x))
    assert out.shape == (N, Cout, H, W), out.shape

    # Like-for-like reference (same bf16 operand quantization) + full-f32 ref.
    ref_q = conv_bn_relu_reference(x, w, operand_dtype=jnp.bfloat16)
    ref_f = conv_bn_relu_reference(x, w, operand_dtype=jnp.float32)
    err_q = float(jnp.max(jnp.abs(out - ref_q)))
    err_f = float(jnp.max(jnp.abs(out - ref_f)))
    # Tolerances allow for MXU operand quantization of the small f32 selector /
    # statistics matmuls; structural bugs would show up as O(0.1-1) errors.
    assert err_q < 3e-2, f"mismatch vs quantized-operand reference: {err_q}"
    assert err_f < 8e-2, f"mismatch vs full-f32 reference: {err_f}"

    # Self-consistency: InstanceNorm output must be ~zero-mean / unit-std per
    # (sample, channel) regardless of conv operand dtype.
    ch_mean = float(jnp.max(jnp.abs(jnp.mean(out, axis=(2, 3)))))
    ch_std = float(jnp.max(jnp.abs(jnp.std(out, axis=(2, 3)) - 1.0)))
    assert ch_mean < 5e-3, f"per-channel mean not ~0: {ch_mean}"
    assert ch_std < 1e-2, f"per-channel std not ~1: {ch_std}"

    print("KERNEL_OK")
</pallas_src>

<mosaic_0001>
module attributes {stable_mosaic.version = 11 : i64} {
  func.func @conv_bn_relu_kernel(%arg0: i32, %arg1: memref<32x216xbf16, #tpu.memory_space<vmem>>, %arg2: memref<216x128xbf16, #tpu.memory_space<vmem>>, %arg3: memref<128x8xf32, #tpu.memory_space<vmem>>, %arg4: memref<8x128xf32, #tpu.memory_space<vmem>>, %arg5: memref<4x64xf32, #tpu.memory_space<vmem>>, %arg6: memref<64x4xf32, #tpu.memory_space<vmem>>, %arg7: memref<32x128xf32, #tpu.memory_space<vmem>>) attributes {dimension_semantics = [#tpu.dimension_semantics<parallel>], iteration_bounds = array<i64: 1>, scalar_prefetch = 0 : i64, scratch_operands = 0 : i64, tpu.core_type = #tpu.core_type<tc>, window_params = [{transform_indices = @transform_0, window_bounds = array<i64: 32, 216>}, {pipeline_mode = #tpu.pipeline_mode<synchronous>, transform_indices = @transform_1, window_bounds = array<i64: 216, 128>}, {pipeline_mode = #tpu.pipeline_mode<synchronous>, transform_indices = @transform_2, window_bounds = array<i64: 128, 8>}, {pipeline_mode = #tpu.pipeline_mode<synchronous>, transform_indices = @transform_3, window_bounds = array<i64: 8, 128>}, {pipeline_mode = #tpu.pipeline_mode<synchronous>, transform_indices = @transform_4, window_bounds = array<i64: 4, 64>}, {pipeline_mode = #tpu.pipeline_mode<synchronous>, transform_indices = @transform_5, window_bounds = array<i64: 64, 4>}, {transform_indices = @transform_6, window_bounds = array<i64: 32, 128>}]} {
    %c0 = arith.constant 0 : index
    %c0_0 = arith.constant 0 : index
    %0 = vector.load %arg1[%c0, %c0_0] : memref<32x216xbf16, #tpu.memory_space<vmem>>, vector<32x216xbf16>
    %c0_1 = arith.constant 0 : index
    %c0_2 = arith.constant 0 : index
    %1 = vector.load %arg2[%c0_1, %c0_2] : memref<216x128xbf16, #tpu.memory_space<vmem>>, vector<216x128xbf16>
    %cst = arith.constant dense<0.000000e+00> : vector<32x128xf32>
    %2 = tpu.matmul %0, %1, %cst {dimension_numbers = #tpu.dot_dimension_numbers<[1], [0], [0], [1], [0, 0, 1, 1], [], []>} : vector<32x216xbf16>, vector<216x128xbf16>, vector<32x128xf32> -> vector<32x128xf32>
    %cst_3 = arith.constant 0.000000e+00 : f32
    %3 = vector.broadcast %cst_3 : f32 to vector<32x128xf32>
    %4 = arith.maximumf %2, %3 : vector<32x128xf32>
    %5 = arith.mulf %4, %4 : vector<32x128xf32>
    %6 = tpu.concatenate %4, %5 in 0 : vector<32x128xf32>, vector<32x128xf32> -> vector<64x128xf32>
    %c0_4 = arith.constant 0 : index
    %c0_5 = arith.constant 0 : index
    %7 = vector.load %arg3[%c0_4, %c0_5] : memref<128x8xf32, #tpu.memory_space<vmem>>, vector<128x8xf32>
    %cst_6 = arith.constant dense<0.000000e+00> : vector<64x8xf32>
    %8 = tpu.matmul %6, %7, %cst_6 {dimension_numbers = #tpu.dot_dimension_numbers<[1], [0], [0], [1], [0, 0, 1, 1], [], []>} : vector<64x128xf32>, vector<128x8xf32>, vector<64x8xf32> -> vector<64x8xf32>
    %c0_7 = arith.constant 0 : index
    %c0_8 = arith.constant 0 : index
    %9 = vector.load %arg5[%c0_7, %c0_8] : memref<4x64xf32, #tpu.memory_space<vmem>>, vector<4x64xf32>
    %cst_9 = arith.constant dense<0.000000e+00> : vector<4x8xf32>
    %10 = tpu.matmul %9, %8, %cst_9 {dimension_numbers = #tpu.dot_dimension_numbers<[1], [0], [0], [1], [0, 0, 1, 1], [], []>} : vector<4x64xf32>, vector<64x8xf32>, vector<4x8xf32> -> vector<4x8xf32>
    %cst_10 = arith.constant 3.906250e-03 : f32
    %11 = vector.broadcast %cst_10 : f32 to vector<4x8xf32>
    %12 = arith.mulf %10, %11 : vector<4x8xf32>
    %13 = vector.extract_strided_slice %12 {offsets = [0, 0], sizes = [2, 8], strides = [1, 1]} : vector<4x8xf32> to vector<2x8xf32>
    %14 = vector.extract_strided_slice %12 {offsets = [2, 0], sizes = [2, 8], strides = [1, 1]} : vector<4x8xf32> to vector<2x8xf32>
    %15 = arith.mulf %13, %13 : vector<2x8xf32>
    %16 = arith.subf %14, %15 : vector<2x8xf32>
    %cst_11 = arith.constant 0.000000e+00 : f32
    %17 = vector.broadcast %cst_11 : f32 to vector<2x8xf32>
    %18 = arith.maximumf %16, %17 : vector<2x8xf32>
    %cst_12 = arith.constant 9.99999974E-6 : f32
    %19 = vector.broadcast %cst_12 : f32 to vector<2x8xf32>
    %20 = arith.addf %18, %19 : vector<2x8xf32>
    %21 = math.rsqrt %20 : vector<2x8xf32>
    %cst_13 = arith.constant 0.000000e+00 : f32
    %22 = vector.broadcast %cst_13 : f32 to vector<2x8xf32>
    %23 = arith.subf %22, %13 : vector<2x8xf32>
    %24 = arith.mulf %23, %21 : vector<2x8xf32>
    %25 = tpu.concatenate %21, %24 in 0 : vector<2x8xf32>, vector<2x8xf32> -> vector<4x8xf32>
    %c0_14 = arith.constant 0 : index
    %c0_15 = arith.constant 0 : index
    %26 = vector.load %arg4[%c0_14, %c0_15] : memref<8x128xf32, #tpu.memory_space<vmem>>, vector<8x128xf32>
    %cst_16 = arith.constant dense<0.000000e+00> : vector<4x128xf32>
    %27 = tpu.matmul %25, %26, %cst_16 {dimension_numbers = #tpu.dot_dimension_numbers<[1], [0], [0], [1], [0, 0, 1, 1], [], []>} : vector<4x8xf32>, vector<8x128xf32>, vector<4x128xf32> -> vector<4x128xf32>
    %c0_17 = arith.constant 0 : index
    %c0_18 = arith.constant 0 : index
    %28 = vector.load %arg6[%c0_17, %c0_18] : memref<64x4xf32, #tpu.memory_space<vmem>>, vector<64x4xf32>
    %cst_19 = arith.constant dense<0.000000e+00> : vector<64x128xf32>
    %29 = tpu.matmul %28, %27, %cst_19 {dimension_numbers = #tpu.dot_dimension_numbers<[1], [0], [0], [1], [0, 0, 1, 1], [], []>} : vector<64x4xf32>, vector<4x128xf32>, vector<64x128xf32> -> vector<64x128xf32>
    %30 = vector.extract_strided_slice %29 {offsets = [0, 0], sizes = [32, 128], strides = [1, 1]} : vector<64x128xf32> to vector<32x128xf32>
    %31 = arith.mulf %4, %30 : vector<32x128xf32>
    %32 = vector.extract_strided_slice %29 {offsets = [32, 0], sizes = [32, 128], strides = [1, 1]} : vector<64x128xf32> to vector<32x128xf32>
    %33 = arith.addf %31, %32 : vector<32x128xf32>
    %c0_20 = arith.constant 0 : index
    %c0_21 = arith.constant 0 : index
    %34 = vector.load %arg7[%c0_20, %c0_21] : memref<32x128xf32, #tpu.memory_space<vmem>>, vector<32x128xf32>
    tpu.vector_store %arg7[%c0_20, %c0_21], %33 {strides = array<i32>} : memref<32x128xf32, #tpu.memory_space<vmem>>, vector<32x128xf32>,
    return
  }
  func.func @transform_0(%arg0: i32) -> (i32, i32) {
    %c0_i32 = arith.constant 0 : i32
    %c0_i32_0 = arith.constant 0 : i32
    return %arg0, %c0_i32 : i32, i32
  }
  func.func @transform_1(%arg0: i32) -> (i32, i32) {
    %c0_i32 = arith.constant 0 : i32
    %c0_i32_0 = arith.constant 0 : i32
    %c0_i32_1 = arith.constant 0 : i32
    return %c0_i32, %c0_i32_0 : i32, i32
  }
  func.func @transform_2(%arg0: i32) -> (i32, i32) {
    %c0_i32 = arith.constant 0 : i32
    %c0_i32_0 = arith.constant 0 : i32
    %c0_i32_1 = arith.constant 0 : i32
    return %c0_i32, %c0_i32_0 : i32, i32
  }
  func.func @transform_3(%arg0: i32) -> (i32, i32) {
    %c0_i32 = arith.constant 0 : i32
    %c0_i32_0 = arith.constant 0 : i32
    %c0_i32_1 = arith.constant 0 : i32
    return %c0_i32, %c0_i32_0 : i32, i32
  }
  func.func @transform_4(%arg0: i32) -> (i32, i32) {
    %c0_i32 = arith.constant 0 : i32
    %c0_i32_0 = arith.constant 0 : i32
    %c0_i32_1 = arith.constant 0 : i32
    return %c0_i32, %c0_i32_0 : i32, i32
  }
  func.func @transform_5(%arg0: i32) -> (i32, i32) {
    %c0_i32 = arith.constant 0 : i32
    %c0_i32_0 = arith.constant 0 : i32
    %c0_i32_1 = arith.constant 0 : i32
    return %c0_i32, %c0_i32_0 : i32, i32
  }
  func.func @transform_6(%arg0: i32) -> (i32, i32) {
    %c0_i32 = arith.constant 0 : i32
    %c0_i32_0 = arith.constant 0 : i32
    return %arg0, %c0_i32 : i32, i32
  }
}

</mosaic_0001>

<llo_original>
// kernel: apply.1
$region0: #{apply.1}
  #allocation0 [shape = 'u32[]', space=smem, size = 0x4, offset = 0x4, fixed_abs, tag = 'smem constant byte address 0x4 - core index']
  #allocation1 [shape = 'u32[144,128]{1,0:T(1,128)}', space=vmem, size = 0x12000, scoped, tag = 'internal scratch']
  %s0 = inlined_call_operand.vmem [shape: bf16[32,216], index: 0, kind: input, shape index: {}]
  %s1 = inlined_call_operand.vmem [shape: bf16[216,128], index: 1, kind: input, shape index: {}]
  %s2 = inlined_call_operand.vmem [shape: f32[128,8], index: 2, kind: input, shape index: {}]
  %s3 = inlined_call_operand.vmem [shape: f32[8,128], index: 3, kind: input, shape index: {}]
  %s4 = inlined_call_operand.vmem [shape: f32[4,64], index: 4, kind: input, shape index: {}]
  %s5 = inlined_call_operand.vmem [shape: f32[64,4], index: 5, kind: input, shape index: {}]
  %s6 = inlined_call_operand.vmem [shape: f32[32,128], index: 6, kind: output, shape index: {}]
  %s7 = sld [smem:[#allocation0]]
  $region34: #{apply.1} parent=0
    _
  %s9 = ssub.s32 1, %s7
  %s10 = scalar_select 0, %s9, %s7
  // Predicated region
  $region2: #{apply.1} parent=0 // pred_check
    _
  $region3: #{apply.1} parent=0 // pred_check_branch
    %12 = sbr.rel (0) target = $region5
  $region4: #{apply.1} parent=0 // pred_region
    _
  $region5: #{apply.1} parent=0 // pred_fallthru
    _
  // Predicated region
  $region6: #{apply.1} parent=0 // pred_check
    _
  $region7: #{apply.1} parent=0 // pred_check_branch
    %14 = sbr.rel (0) target = $region9
  $region8: #{apply.1} parent=0 // pred_region
    _
  $region9: #{apply.1} parent=0 // pred_fallthru
    _
  // Predicated region
  $region10: #{apply.1} parent=0 // pred_check
    _
  $region11: #{apply.1} parent=0 // pred_check_branch
    %16 = sbr.rel (0) target = $region13
  $region12: #{apply.1} parent=0 // pred_region
    _
  $region13: #{apply.1} parent=0 // pred_fallthru
    _
  // Predicated region
  $region14: #{apply.1} parent=0 // pred_check
    _
  $region15: #{apply.1} parent=0 // pred_check_branch
    %18 = sbr.rel (0) target = $region17
  $region16: #{apply.1} parent=0 // pred_region
    _
  $region17: #{apply.1} parent=0 // pred_fallthru
    _
  // Predicated region
  $region18: #{apply.1} parent=0 // pred_check
    _
  $region19: #{apply.1} parent=0 // pred_check_branch
    %20 = sbr.rel (0) target = $region21
  $region20: #{apply.1} parent=0 // pred_region
    _
  $region21: #{apply.1} parent=0 // pred_fallthru
    _
  // Predicated region
  $region22: #{apply.1} parent=0 // pred_check
    _
  $region23: #{apply.1} parent=0 // pred_check_branch
    %22 = sbr.rel (0) target = $region25
  $region24: #{apply.1} parent=0 // pred_region
    _
  $region25: #{apply.1} parent=0 // pred_fallthru
    _
  %v24 = vld [vmem:[%s0] sm:$0xff]
  %v25 = vld [vmem:[%s0 + $0x8] sm:$0xff]
  %v26 = vld [vmem:[%s0 + $0x10] sm:$0xff]
  %v27 = vld [vmem:[%s0 + $0x18] sm:$0xff]
  %v28 = vld [vmem:[%s1] sm:$0xf]
  %v29 = vld [vmem:[%s1 + $0x4] sm:$0xf]
  %v30 = vld [vmem:[%s1 + $0x8] sm:$0xf]
  %v31 = vld [vmem:[%s1 + $0xc] sm:$0xf]
  %v32 = vld [vmem:[%s1 + $0x10] sm:$0xf]
  %v33 = vld [vmem:[%s1 + $0x14] sm:$0xf]
  %v34 = vld [vmem:[%s1 + $0x18] sm:$0xf]
  %v35 = vld [vmem:[%s1 + $0x1c] sm:$0xf]
  %v36 = vld [vmem:[%s1 + $0x20] sm:$0xf]
  %v37 = vld [vmem:[%s1 + $0x24] sm:$0xf]
  %v38 = vld [vmem:[%s1 + $0x28] sm:$0xf]
  %v39 = vld [vmem:[%s1 + $0x2c] sm:$0xf]
  %v40 = vld [vmem:[%s1 + $0x30] sm:$0xf]
  %v41 = vld [vmem:[%s1 + $0x34] sm:$0xf]
  %v42 = vld [vmem:[%s1 + $0x38] sm:$0xf]
  %v43 = vld [vmem:[%s1 + $0x3c] sm:$0xf]
  %v44 = vld [vmem:[%s1 + $0x40] sm:$0xf]
  %v45 = vld [vmem:[%s1 + $0x44] sm:$0xf]
  %v46 = vld [vmem:[%s1 + $0x48] sm:$0xf]
  %v47 = vld [vmem:[%s1 + $0x4c] sm:$0xf]
  %v48 = vld [vmem:[%s1 + $0x50] sm:$0xf]
  %v49 = vld [vmem:[%s1 + $0x54] sm:$0xf]
  %v50 = vld [vmem:[%s1 + $0x58] sm:$0xf]
  %v51 = vld [vmem:[%s1 + $0x5c] sm:$0xf]
  %v52 = vld [vmem:[%s1 + $0x60] sm:$0xf]
  %v53 = vld [vmem:[%s1 + $0x64] sm:$0xf]
  %v54 = vld [vmem:[%s1 + $0x68] sm:$0xf]
  %v59 = vunpack.c.l.b16 %v24
  %v60 = vunpack.c.h.b16 %v24
  %v61 = vunpack.c.l.b16 %v25
  %v62 = vunpack.c.h.b16 %v25
  %v63 = vunpack.c.l.b16 %v26
  %v64 = vunpack.c.h.b16 %v26
  %v65 = vunpack.c.l.b16 %v27
  %v66 = vunpack.c.h.b16 %v27
  %v67 = vpack.c.b16 %v61, %v59
  %v68 = vpack.c.b16 %v62, %v60
  %v69 = vpack.c.b16 %v65, %v63
  %v70 = vpack.c.b16 %v66, %v64
  %v100 = vunpack.c.l.b16 %v28
  %v101 = vunpack.c.l.b16 %v29
  %v102 = vunpack.c.l.b16 %v30
  %v103 = vunpack.c.l.b16 %v31
  %v104 = vunpack.c.l.b16 %v32
  %v105 = vunpack.c.l.b16 %v33
  %v106 = vunpack.c.l.b16 %v34
  %v107 = vunpack.c.l.b16 %v35
  %v108 = vunpack.c.l.b16 %v36
  %v109 = vunpack.c.l.b16 %v37
  %v110 = vunpack.c.l.b16 %v38
  %v111 = vunpack.c.l.b16 %v39
  %v112 = vunpack.c.l.b16 %v40
  %v113 = vunpack.c.l.b16 %v41
  %v114 = vunpack.c.l.b16 %v42
  %v115 = vunpack.c.l.b16 %v43
  %v116 = vunpack.c.l.b16 %v44
  %v117 = vunpack.c.l.b16 %v45
  %v118 = vunpack.c.l.b16 %v46
  %v119 = vunpack.c.l.b16 %v47
  %v120 = vunpack.c.l.b16 %v48
  %v121 = vunpack.c.l.b16 %v49
  %v122 = vunpack.c.l.b16 %v50
  %v123 = vunpack.c.l.b16 %v51
  %v124 = vunpack.c.l.b16 %v52
  %v125 = vunpack.c.l.b16 %v53
  %v126 = vunpack.c.l.b16 %v54
  %v127 = vpack.c.b16 %v101, %v100
  %v128 = vpack.c.b16 %v103, %v102
  %v129 = vpack.c.b16 %v105, %v104
  %v130 = vpack.c.b16 %v107, %v106
  %v131 = vpack.c.b16 %v109, %v108
  %v132 = vpack.c.b16 %v111, %v110
  %v133 = vpack.c.b16 %v113, %v112
  %v134 = vpack.c.b16 %v115, %v114
  %v135 = vpack.c.b16 %v117, %v116
  %v136 = vpack.c.b16 %v119, %v118
  %v137 = vpack.c.b16 %v121, %v120
  %v138 = vpack.c.b16 %v123, %v122
  %v139 = vpack.c.b16 %v125, %v124
  %v140 = vpack.c.b16 %v126, %v126
  %vm154 = vcmask 719872
  %v156 = vsel %vm154, %v68, 0
  %v159 = vsel %vm154, %v70, 0
  %vm161 = vcmask 1043456
  %v163 = vsel %vm161, %v140, 0
  %165 = vmatprep.subr.bf16.mxu0 0
  %166 = vmatpush1.bf16.msra.mxu0 %v127
  %167 = vmatprep.subr.bf16.mxu0 0
  %168 = vmatpush1.bf16.msra.mxu0 %v128
  %169 = vmatprep.subr.bf16.mxu0 0
  %170 = vmatpush1.bf16.msra.mxu0 %v129
  %171 = vmatprep.subr.bf16.mxu0 0
  %172 = vmatpush1.bf16.msra.mxu0 %v130
  %173 = vmatprep.subr.bf16.mxu0 0
  %174 = vmatpush1.bf16.msra.mxu0 %v131
  %175 = vmatprep.subr.bf16.mxu0 0
  %176 = vmatpush1.bf16.msra.mxu0 %v132
  %177 = vmatprep.subr.bf16.mxu0 0
  %178 = vmatpush1.bf16.msra.mxu0 %v133
  %179 = vmatprep.subr.bf16.mxu0 0
  %180 = vmatpush1.bf16.msra.mxu0 %v134
  %181 = vmatprep.subr.bf16.mxu0 0
  %182 = vmatpush1.bf16.msra.mxu0 %v135
  %183 = vmatprep.subr.bf16.mxu0 0
  %184 = vmatpush1.bf16.msra.mxu0 %v136
  %185 = vmatprep.subr.bf16.mxu0 0
  %186 = vmatpush1.bf16.msra.mxu0 %v137
  %187 = vmatprep.subr.bf16.mxu0 0
  %188 = vmatpush1.bf16.msra.mxu0 %v138
  %189 = vmatprep.subr.bf16.mxu0 0
  %190 = vmatpush1.bf16.msra.mxu0 %v139
  %191 = vmatprep.subr.bf16.mxu0 0
  %192 = vmatpush1.bf16.msra.mxu0 %v163
  %193 = vmatprep.subr.bf16.mxu0 0
  %194 = vmatpush1.bf16.msra.mxu0 0
  %195 = vmatprep.subr.bf16.mxu0 0
  %196 = vmatpush1.bf16.msra.mxu0 0
  %197 = vmatprep.mubr.bf16.mxu0 %v156
  %198 = vmatmul.mubr.bf16.gmra.mrb[0].mxu0 %v67
  %v199 = vpop.f32.mrb[0].mxu0
  %v200 = vadd.f32 0.0, %v199
  %v201 = vpop.f32.mrb[0].mxu0
  %v202 = vpop.f32.mrb[0].mxu0
  %v203 = vadd.f32 0.0, %v202
  %v204 = vpop.f32.mrb[0].mxu0
  %205 = vmatprep.mubr.bf16.mxu0 %v159
  %206 = vmatmul.mubr.bf16.gmra.mrb[0].mxu0 %v69
  %v207 = vpop.f32.mrb[0].mxu0
  %v208 = vadd.f32 0.0, %v207
  %v209 = vpop.f32.mrb[0].mxu0
  %v210 = vpop.f32.mrb[0].mxu0
  %v211 = vadd.f32 0.0, %v210
  %v212 = vpop.f32.mrb[0].mxu0
  %213 = vdwg.mxu0
  %v214 = vmax.f32 %v200, 0.0
  %v215 = vmax.f32 %v203, 0.0
  %v216 = vmax.f32 %v208, 0.0
  %v217 = vmax.f32 %v211, 0.0
  %v218 = vmul.f32 %v214, %v214
  %v219 = vmul.f32 %v215, %v215
  %v220 = vmul.f32 %v216, %v216
  %v221 = vmul.f32 %v217, %v217
  %v222 = vld [vmem:[%s2] sm:$0xff]
  %v223 = vld [vmem:[%s2 + $0x8] sm:$0xff]
  %v224 = vld [vmem:[%s2 + $0x10] sm:$0xff]
  %v225 = vld [vmem:[%s2 + $0x18] sm:$0xff]
  %v226 = vld [vmem:[%s2 + $0x20] sm:$0xff]
  %v227 = vld [vmem:[%s2 + $0x28] sm:$0xff]
  %v228 = vld [vmem:[%s2 + $0x30] sm:$0xff]
  %v229 = vld [vmem:[%s2 + $0x38] sm:$0xff]
  %v230 = vld [vmem:[%s2 + $0x40] sm:$0xff]
  %v231 = vld [vmem:[%s2 + $0x48] sm:$0xff]
  %v232 = vld [vmem:[%s2 + $0x50] sm:$0xff]
  %v233 = vld [vmem:[%s2 + $0x58] sm:$0xff]
  %v234 = vld [vmem:[%s2 + $0x60] sm:$0xff]
  %v235 = vld [vmem:[%s2 + $0x68] sm:$0xff]
  %v236 = vld [vmem:[%s2 + $0x70] sm:$0xff]
  %v237 = vld [vmem:[%s2 + $0x78] sm:$0xff]
  %238 = vmatprep.subr.mxu0 0.0
  %239 = vmatpush1.msra.mxu0 %v222
  %240 = vmatprep.subr.mxu0 0.0
  %241 = vmatpush1.msra.mxu0 %v223
  %242 = vmatprep.subr.mxu0 0.0
  %243 = vmatpush1.msra.mxu0 %v224
  %244 = vmatprep.subr.mxu0 0.0
  %245 = vmatpush1.msra.mxu0 %v225
  %246 = vmatprep.subr.mxu0 0.0
  %247 = vmatpush1.msra.mxu0 %v226
  %248 = vmatprep.subr.mxu0 0.0
  %249 = vmatpush1.msra.mxu0 %v227
  %250 = vmatprep.subr.mxu0 0.0
  %251 = vmatpush1.msra.mxu0 %v228
  %252 = vmatprep.subr.mxu0 0.0
  %253 = vmatpush1.msra.mxu0 %v229
  %254 = vmatprep.subr.mxu0 0.0
  %255 = vmatpush1.msra.mxu0 %v230
  %256 = vmatprep.subr.mxu0 0.0
  %257 = vmatpush1.msra.mxu0 %v231
  %258 = vmatprep.subr.mxu0 0.0
  %259 = vmatpush1.msra.mxu0 %v232
  %260 = vmatprep.subr.mxu0 0.0
  %261 = vmatpush1.msra.mxu0 %v233
  %262 = vmatprep.subr.mxu0 0.0
  %263 = vmatpush1.msra.mxu0 %v234
  %264 = vmatprep.subr.mxu0 0.0
  %265 = vmatpush1.msra.mxu0 %v235
  %266 = vmatprep.subr.mxu0 0.0
  %267 = vmatpush1.msra.mxu0 %v236
  %268 = vmatprep.subr.mxu0 0.0
  %269 = vmatpush1.msra.mxu0 %v237
  %270 = vmatprep.subr.mxu0 0.0
  %271 = vmatpush1.msra.mxu0 0.0
  %272 = vmatprep.subr.mxu0 0.0
  %273 = vmatpush1.msra.mxu0 0.0
  %274 = vmatprep.subr.mxu0 0.0
  %275 = vmatpush1.msra.mxu0 0.0
  %276 = vmatprep.subr.mxu0 0.0
  %277 = vmatpush1.msra.mxu0 0.0
  %278 = vmatprep.subr.mxu0 0.0
  %279 = vmatpush1.msra.mxu0 0.0
  %280 = vmatprep.subr.mxu0 0.0
  %281 = vmatpush1.msra.mxu0 0.0
  %282 = vmatprep.subr.mxu0 0.0
  %283 = vmatpush1.msra.mxu0 0.0
  %284 = vmatprep.subr.mxu0 0.0
  %285 = vmatpush1.msra.mxu0 0.0
  %286 = vmatprep.subr.mxu0 0.0
  %287 = vmatpush1.msra.mxu0 0.0
  %288 = vmatprep.subr.mxu0 0.0
  %289 = vmatpush1.msra.mxu0 0.0
  %290 = vmatprep.subr.mxu0 0.0
  %291 = vmatpush1.msra.mxu0 0.0
  %292 = vmatprep.subr.mxu0 0.0
  %293 = vmatpush1.msra.mxu0 0.0
  %294 = vmatprep.subr.mxu0 0.0
  %295 = vmatpush1.msra.mxu0 0.0
  %296 = vmatprep.subr.mxu0 0.0
  %297 = vmatpush1.msra.mxu0 0.0
  %298 = vmatprep.subr.mxu0 0.0
  %299 = vmatpush1.msra.mxu0 0.0
  %300 = vmatprep.subr.mxu0 0.0
  %301 = vmatpush1.msra.mxu0 0.0
  %302 = vmatprep.mubr.f32.mxu0 0.0
  %303 = vmatmul.mubr.f32.gmra.mrb[0].mxu0 %v214
  %v304 = vpop.f32.mrb[0].mxu0
  %v305 = vadd.f32 0.0, %v304
  %v306 = vpop.f32.mrb[0].mxu0
  %307 = vmatprep.mubr.f32.mxu0 0.0
  %308 = vmatmul.mubr.f32.gmra.mrb[0].mxu0 %v215
  %v309 = vpop.f32.mrb[0].mxu0
  %v310 = vadd.f32 0.0, %v309
  %v311 = vpop.f32.mrb[0].mxu0
  %312 = vmatprep.mubr.f32.mxu0 0.0
  %313 = vmatmul.mubr.f32.gmra.mrb[0].mxu0 %v216
  %v314 = vpop.f32.mrb[0].mxu0
  %v315 = vadd.f32 0.0, %v314
  %v316 = vpop.f32.mrb[0].mxu0
  %317 = vmatprep.mubr.f32.mxu0 0.0
  %318 = vmatmul.mubr.f32.gmra.mrb[0].mxu0 %v217
  %v319 = vpop.f32.mrb[0].mxu0
  %v320 = vadd.f32 0.0, %v319
  %v321 = vpop.f32.mrb[0].mxu0
  %322 = vmatprep.mubr.f32.mxu0 0.0
  %323 = vmatmul.mubr.f32.gmra.mrb[0].mxu0 %v218
  %v324 = vpop.f32.mrb[0].mxu0
  %v325 = vadd.f32 0.0, %v324
  %v326 = vpop.f32.mrb[0].mxu0
  %327 = vmatprep.mubr.f32.mxu0 0.0
  %328 = vmatmul.mubr.f32.gmra.mrb[0].mxu0 %v219
  %v329 = vpop.f32.mrb[0].mxu0
  %v330 = vadd.f32 0.0, %v329
  %v331 = vpop.f32.mrb[0].mxu0
  %332 = vmatprep.mubr.f32.mxu0 0.0
  %333 = vmatmul.mubr.f32.gmra.mrb[0].mxu0 %v220
  %v334 = vpop.f32.mrb[0].mxu0
  %v335 = vadd.f32 0.0, %v334
  %v336 = vpop.f32.mrb[0].mxu0
  %337 = vmatprep.mubr.f32.mxu0 0.0
  %338 = vmatmul.mubr.f32.gmra.mrb[0].mxu0 %v221
  %v339 = vpop.f32.mrb[0].mxu0
  %v340 = vadd.f32 0.0, %v339
  %v341 = vpop.f32.mrb[0].mxu0
  %342 = vdwg.mxu0
  %v343 = vld [vmem:[%s4] sm:$0xf]
  %vm344 = vcmask 523264
  %v346 = vsel %vm344, %v343, 0
  %348 = vmatprep.subr.mxu0 0.0
  %349 = vmatpush1.msra.mxu0 %v305
  %350 = vmatprep.subr.mxu0 0.0
  %351 = vmatpush1.msra.mxu0 %v310
  %352 = vmatprep.subr.mxu0 0.0
  %353 = vmatpush1.msra.mxu0 %v315
  %354 = vmatprep.subr.mxu0 0.0
  %355 = vmatpush1.msra.mxu0 %v320
  %356 = vmatprep.subr.mxu0 0.0
  %357 = vmatpush1.msra.mxu0 %v325
  %358 = vmatprep.subr.mxu0 0.0
  %359 = vmatpush1.msra.mxu0 %v330
  %360 = vmatprep.subr.mxu0 0.0
  %361 = vmatpush1.msra.mxu0 %v335
  %362 = vmatprep.subr.mxu0 0.0
  %363 = vmatpush1.msra.mxu0 %v340
  %364 = vmatprep.subr.mxu0 0.0
  %365 = vmatpush1.msra.mxu0 0.0
  %366 = vmatprep.subr.mxu0 0.0
  %367 = vmatpush1.msra.mxu0 0.0
  %368 = vmatprep.subr.mxu0 0.0
  %369 = vmatpush1.msra.mxu0 0.0
  %370 = vmatprep.subr.mxu0 0.0
  %371 = vmatpush1.msra.mxu0 0.0
  %372 = vmatprep.subr.mxu0 0.0
  %373 = vmatpush1.msra.mxu0 0.0
  %374 = vmatprep.subr.mxu0 0.0
  %375 = vmatpush1.msra.mxu0 0.0
  %376 = vmatprep.subr.mxu0 0.0
  %377 = vmatpush1.msra.mxu0 0.0
  %378 = vmatprep.subr.mxu0 0.0
  %379 = vmatpush1.msra.mxu0 0.0
  %380 = vmatprep.subr.mxu0 0.0
  %381 = vmatpush1.msra.mxu0 0.0
  %382 = vmatprep.subr.mxu0 0.0
  %383 = vmatpush1.msra.mxu0 0.0
  %384 = vmatprep.subr.mxu0 0.0
  %385 = vmatpush1.msra.mxu0 0.0
  %386 = vmatprep.subr.mxu0 0.0
  %387 = vmatpush1.msra.mxu0 0.0
  %388 = vmatprep.subr.mxu0 0.0
  %389 = vmatpush1.msra.mxu0 0.0
  %390 = vmatprep.subr.mxu0 0.0
  %391 = vmatpush1.msra.mxu0 0.0
  %392 = vmatprep.subr.mxu0 0.0
  %393 = vmatpush1.msra.mxu0 0.0
  %394 = vmatprep.subr.mxu0 0.0
  %395 = vmatpush1.msra.mxu0 0.0
  %396 = vmatprep.subr.mxu0 0.0
  %397 = vmatpush1.msra.mxu0 0.0
  %398 = vmatprep.subr.mxu0 0.0
  %399 = vmatpush1.msra.mxu0 0.0
  %400 = vmatprep.subr.mxu0 0.0
  %401 = vmatpush1.msra.mxu0 0.0
  %402 = vmatprep.subr.mxu0 0.0
  %403 = vmatpush1.msra.mxu0 0.0
  %404 = vmatprep.subr.mxu0 0.0
  %405 = vmatpush1.msra.mxu0 0.0
  %406 = vmatprep.subr.mxu0 0.0
  %407 = vmatpush1.msra.mxu0 0.0
  %408 = vmatprep.subr.mxu0 0.0
  %409 = vmatpush1.msra.mxu0 0.0
  %410 = vmatprep.subr.mxu0 0.0
  %411 = vmatpush1.msra.mxu0 0.0
  %412 = vmatprep.mubr.f32.mxu0 0.0
  %413 = vmatmul.mubr.f32.gmra.mrb[0].mxu0 %v346
  %v414 = vpop.f32.mrb[0].mxu0
  %v415 = vadd.f32 0.0, %v414
  %v416 = vpop.f32.mrb[0].mxu0
  %417 = vdwg.mxu0
  %v418 = vmul.f32 %v415, 0.00390625
  %v419 = vmul.f32 %v418, %v418
  %v421 = vrot.slane %v419, 6
  %v423 = vsub.f32 %v418, %v421
  %v424 = vmax.f32 %v423, 0.0
  %v425 = vadd.f32 %v424, 1e-05
  %v426 = vrsqrt.pop %v425
  %v427 = vsub.f32 0.0, %v418
  %v429 = vrot.slane %v426, 2
  %v431 = vmul.f32 %v427, %v429
  %v433 = vrot.slane %v431, 6
  %vm435 = vcmask 1041408
  %v436 = vsel %vm435, %v429, %v433
  %v437 = vld [vmem:[%s3] sm:$0xff]
  %vm438 = vcmask 64512
  %v440 = vsel %vm438, %v436, 0
  %442 = vmatprep.subr.mxu0 0.0
  %443 = vmatpush1.msra.mxu0 %v437
  %444 = vmatprep.subr.mxu0 0.0
  %445 = vmatpush1.msra.mxu0 0.0
  %446 = vmatprep.subr.mxu0 0.0
  %447 = vmatpush1.msra.mxu0 0.0
  %448 = vmatprep.subr.mxu0 0.0
  %449 = vmatpush1.msra.mxu0 0.0
  %450 = vmatprep.subr.mxu0 0.0
  %451 = vmatpush1.msra.mxu0 0.0
  %452 = vmatprep.subr.mxu0 0.0
  %453 = vmatpush1.msra.mxu0 0.0
  %454 = vmatprep.subr.mxu0 0.0
  %455 = vmatpush1.msra.mxu0 0.0
  %456 = vmatprep.subr.mxu0 0.0
  %457 = vmatpush1.msra.mxu0 0.0
  %458 = vmatprep.subr.mxu0 0.0
  %459 = vmatpush1.msra.mxu0 0.0
  %460 = vmatprep.subr.mxu0 0.0
  %461 = vmatpush1.msra.mxu0 0.0
  %462 = vmatprep.subr.mxu0 0.0
  %463 = vmatpush1.msra.mxu0 0.0
  %464 = vmatprep.subr.mxu0 0.0
  %465 = vmatpush1.msra.mxu0 0.0
  %466 = vmatprep.subr.mxu0 0.0
  %467 = vmatpush1.msra.mxu0 0.0
  %468 = vmatprep.subr.mxu0 0.0
  %469 = vmatpush1.msra.mxu0 0.0
  %470 = vmatprep.subr.mxu0 0.0
  %471 = vmatpush1.msra.mxu0 0.0
  %472 = vmatprep.subr.mxu0 0.0
  %473 = vmatpush1.msra.mxu0 0.0
  %474 = vmatprep.subr.mxu0 0.0
  %475 = vmatpush1.msra.mxu0 0.0
  %476 = vmatprep.subr.mxu0 0.0
  %477 = vmatpush1.msra.mxu0 0.0
  %478 = vmatprep.subr.mxu0 0.0
  %479 = vmatpush1.msra.mxu0 0.0
  %480 = vmatprep.subr.mxu0 0.0
  %481 = vmatpush1.msra.mxu0 0.0
  %482 = vmatprep.subr.mxu0 0.0
  %483 = vmatpush1.msra.mxu0 0.0
  %484 = vmatprep.subr.mxu0 0.0
  %485 = vmatpush1.msra.mxu0 0.0
  %486 = vmatprep.subr.mxu0 0.0
  %487 = vmatpush1.msra.mxu0 0.0
  %488 = vmatprep.subr.mxu0 0.0
  %489 = vmatpush1.msra.mxu0 0.0
  %490 = vmatprep.subr.mxu0 0.0
  %491 = vmatpush1.msra.mxu0 0.0
  %492 = vmatprep.subr.mxu0 0.0
  %493 = vmatpush1.msra.mxu0 0.0
  %494 = vmatprep.subr.mxu0 0.0
  %495 = vmatpush1.msra.mxu0 0.0
  %496 = vmatprep.subr.mxu0 0.0
  %497 = vmatpush1.msra.mxu0 0.0
  %498 = vmatprep.subr.mxu0 0.0
  %499 = vmatpush1.msra.mxu0 0.0
  %500 = vmatprep.subr.mxu0 0.0
  %501 = vmatpush1.msra.mxu0 0.0
  %502 = vmatprep.subr.mxu0 0.0
  %503 = vmatpush1.msra.mxu0 0.0
  %504 = vmatprep.subr.mxu0 0.0
  %505 = vmatpush1.msra.mxu0 0.0
  %506 = vmatprep.mubr.f32.mxu0 0.0
  %507 = vmatmul.mubr.f32.gmra.mrb[0].mxu0 %v440
  %v508 = vpop.f32.mrb[0].mxu0
  %v509 = vadd.f32 0.0, %v508
  %v510 = vpop.f32.mrb[0].mxu0
  %511 = vdwg.mxu0
  %v512 = vld [vmem:[%s5] sm:$0xff]
  %v513 = vld [vmem:[%s5 + $0x8] sm:$0xff]
  %v514 = vld [vmem:[%s5 + $0x10] sm:$0xff]
  %v515 = vld [vmem:[%s5 + $0x18] sm:$0xff]
  %v516 = vld [vmem:[%s5 + $0x20] sm:$0xff]
  %v517 = vld [vmem:[%s5 + $0x28] sm:$0xff]
  %v518 = vld [vmem:[%s5 + $0x30] sm:$0xff]
  %v519 = vld [vmem:[%s5 + $0x38] sm:$0xff]
  %vm520 = vcmask 31744
  %v522 = vsel %vm520, %v512, 0
  %v525 = vsel %vm520, %v513, 0
  %v528 = vsel %vm520, %v514, 0
  %v531 = vsel %vm520, %v515, 0
  %v534 = vsel %vm520, %v516, 0
  %v537 = vsel %vm520, %v517, 0
  %v540 = vsel %vm520, %v518, 0
  %v543 = vsel %vm520, %v519, 0
  %v546 = vsel %vm161, %v509, 0
  %548 = vmatprep.subr.mxu0 0.0
  %549 = vmatpush1.msra.mxu0 %v546
  %550 = vmatprep.subr.mxu0 0.0
  %551 = vmatpush1.msra.mxu0 0.0
  %552 = vmatprep.subr.mxu0 0.0
  %553 = vmatpush1.msra.mxu0 0.0
  %554 = vmatprep.subr.mxu0 0.0
  %555 = vmatpush1.msra.mxu0 0.0
  %556 = vmatprep.subr.mxu0 0.0
  %557 = vmatpush1.msra.mxu0 0.0
  %558 = vmatprep.subr.mxu0 0.0
  %559 = vmatpush1.msra.mxu0 0.0
  %560 = vmatprep.subr.mxu0 0.0
  %561 = vmatpush1.msra.mxu0 0.0
  %562 = vmatprep.subr.mxu0 0.0
  %563 = vmatpush1.msra.mxu0 0.0
  %564 = vmatprep.subr.mxu0 0.0
  %565 = vmatpush1.msra.mxu0 0.0
  %566 = vmatprep.subr.mxu0 0.0
  %567 = vmatpush1.msra.mxu0 0.0
  %568 = vmatprep.subr.mxu0 0.0
  %569 = vmatpush1.msra.mxu0 0.0
  %570 = vmatprep.subr.mxu0 0.0
  %571 = vmatpush1.msra.mxu0 0.0
  %572 = vmatprep.subr.mxu0 0.0
  %573 = vmatpush1.msra.mxu0 0.0
  %574 = vmatprep.subr.mxu0 0.0
  %575 = vmatpush1.msra.mxu0 0.0
  %576 = vmatprep.subr.mxu0 0.0
  %577 = vmatpush1.msra.mxu0 0.0
  %578 = vmatprep.subr.mxu0 0.0
  %579 = vmatpush1.msra.mxu0 0.0
  %580 = vmatprep.subr.mxu0 0.0
  %581 = vmatpush1.msra.mxu0 0.0
  %582 = vmatprep.subr.mxu0 0.0
  %583 = vmatpush1.msra.mxu0 0.0
  %584 = vmatprep.subr.mxu0 0.0
  %585 = vmatpush1.msra.mxu0 0.0
  %586 = vmatprep.subr.mxu0 0.0
  %587 = vmatpush1.msra.mxu0 0.0
  %588 = vmatprep.subr.mxu0 0.0
  %589 = vmatpush1.msra.mxu0 0.0
  %590 = vmatprep.subr.mxu0 0.0
  %591 = vmatpush1.msra.mxu0 0.0
  %592 = vmatprep.subr.mxu0 0.0
  %593 = vmatpush1.msra.mxu0 0.0
  %594 = vmatprep.subr.mxu0 0.0
  %595 = vmatpush1.msra.mxu0 0.0
  %596 = vmatprep.subr.mxu0 0.0
  %597 = vmatpush1.msra.mxu0 0.0
  %598 = vmatprep.subr.mxu0 0.0
  %599 = vmatpush1.msra.mxu0 0.0
  %600 = vmatprep.subr.mxu0 0.0
  %601 = vmatpush1.msra.mxu0 0.0
  %602 = vmatprep.subr.mxu0 0.0
  %603 = vmatpush1.msra.mxu0 0.0
  %604 = vmatprep.subr.mxu0 0.0
  %605 = vmatpush1.msra.mxu0 0.0
  %606 = vmatprep.subr.mxu0 0.0
  %607 = vmatpush1.msra.mxu0 0.0
  %608 = vmatprep.subr.mxu0 0.0
  %609 = vmatpush1.msra.mxu0 0.0
  %610 = vmatprep.subr.mxu0 0.0
  %611 = vmatpush1.msra.mxu0 0.0
  %612 = vmatprep.mubr.f32.mxu0 0.0
  %613 = vmatmul.mubr.f32.gmra.mrb[0].mxu0 %v522
  %v614 = vpop.f32.mrb[0].mxu0
  %v615 = vadd.f32 0.0, %v614
  %v616 = vpop.f32.mrb[0].mxu0
  %617 = vmatprep.mubr.f32.mxu0 0.0
  %618 = vmatmul.mubr.f32.gmra.mrb[0].mxu0 %v525
  %v619 = vpop.f32.mrb[0].mxu0
  %v620 = vadd.f32 0.0, %v619
  %v621 = vpop.f32.mrb[0].mxu0
  %622 = vmatprep.mubr.f32.mxu0 0.0
  %623 = vmatmul.mubr.f32.gmra.mrb[0].mxu0 %v528
  %v624 = vpop.f32.mrb[0].mxu0
  %v625 = vadd.f32 0.0, %v624
  %v626 = vpop.f32.mrb[0].mxu0
  %627 = vmatprep.mubr.f32.mxu0 0.0
  %628 = vmatmul.mubr.f32.gmra.mrb[0].mxu0 %v531
  %v629 = vpop.f32.mrb[0].mxu0
  %v630 = vadd.f32 0.0, %v629
  %v631 = vpop.f32.mrb[0].mxu0
  %632 = vmatprep.mubr.f32.mxu0 0.0
  %633 = vmatmul.mubr.f32.gmra.mrb[0].mxu0 %v534
  %v634 = vpop.f32.mrb[0].mxu0
  %v635 = vadd.f32 0.0, %v634
  %v636 = vpop.f32.mrb[0].mxu0
  %637 = vmatprep.mubr.f32.mxu0 0.0
  %638 = vmatmul.mubr.f32.gmra.mrb[0].mxu0 %v537
  %v639 = vpop.f32.mrb[0].mxu0
  %v640 = vadd.f32 0.0, %v639
  %v641 = vpop.f32.mrb[0].mxu0
  %642 = vmatprep.mubr.f32.mxu0 0.0
  %643 = vmatmul.mubr.f32.gmra.mrb[0].mxu0 %v540
  %v644 = vpop.f32.mrb[0].mxu0
  %v645 = vadd.f32 0.0, %v644
  %v646 = vpop.f32.mrb[0].mxu0
  %647 = vmatprep.mubr.f32.mxu0 0.0
  %648 = vmatmul.mubr.f32.gmra.mrb[0].mxu0 %v543
  %v649 = vpop.f32.mrb[0].mxu0
  %v650 = vadd.f32 0.0, %v649
  %v651 = vpop.f32.mrb[0].mxu0
  %652 = vdwg.mxu0
  %v653 = vmul.f32 %v214, %v615
  %v654 = vmul.f32 %v215, %v620
  %v655 = vmul.f32 %v216, %v625
  %v656 = vmul.f32 %v217, %v630
  %v657 = vadd.f32 %v653, %v635
  %v658 = vadd.f32 %v654, %v640
  %v659 = vadd.f32 %v655, %v645
  %v660 = vadd.f32 %v656, %v650
  %661 = vst [vmem:[%s6] sm:$0xff] %v657
  %662 = vst [vmem:[%s6 + $0x8] sm:$0xff] %v658
  %663 = vst [vmem:[%s6 + $0x10] sm:$0xff] %v659
  %664 = vst [vmem:[%s6 + $0x18] sm:$0xff] %v660
  // Predicated region
  $region26: #{apply.1} parent=0 // pred_check
    _
  $region27: #{apply.1} parent=0 // pred_check_branch
    %666 = sbr.rel (0) target = $region29
  $region28: #{apply.1} parent=0 // pred_region
    _
  $region29: #{apply.1} parent=0 // pred_fallthru
    _
  // Predicated region
  $region30: #{apply.1} parent=0 // pred_check
    _
  $region31: #{apply.1} parent=0 // pred_check_branch
    %668 = sbr.rel (0) target = $region33
  $region32: #{apply.1} parent=0 // pred_region
    _
  $region33: #{apply.1} parent=0 // pred_fallthru
    _

</llo_original>
